<compile_context>
chip_gen: v5e
topology: v5e:2x2
jax: 0.10.0
libtpu: 0.0.40
codegen_flags: <defaults>
</compile_context>

<pallas_src>
import jax
import jax.numpy as jnp
from jax import lax
from jax.experimental import pallas as pl
from jax.experimental.pallas import tpu as pltpu


def _stack_kernel(cp_ref, w1_ref, w2_ref, aud_ref, scan_ref, g_ref, out_ref):
    # Block shapes (per grid step g; LPC = lane_pack * C):
    #   cp_ref  : (1, F, LPC)            control plane; frames on sublanes, (batch,chan) on lanes
    #   w1_ref  : (NB, LPC, LPC)         block-diag w1^T          (constant index_map -> resident)
    #   w2_ref  : (NB, LPC, LPC)         block-diag w2^T
    #   aud_ref : (NB, LPC, LPC)         block-diag (softmax(mix)[i] * audio_i)^T
    #   scan_ref: (NB*(K+1), F, LPC)     doubling-scan coefs: [d, mask*d^1, mask*d^2, mask*d^4,..]
    #   g_ref   : (NB, 1, LPC)           sigmoid(gains) * max_gain
    #   out_ref : (1, F, LPC)            mixed audio, (frame, batch*channel) layout
    n_blocks = w1_ref.shape[0]
    F, LPC = cp_ref.shape[1], cp_ref.shape[2]
    n_scan = scan_ref.shape[0] // n_blocks - 1            # = ceil(log2(F))

    def body(i, carry):
        cp, acc = carry                                                   # (F, LPC) each
        base = i * (n_scan + 1)
        x = jnp.dot(cp, w1_ref[i], preferred_element_type=jnp.float32)    # w1 @ cp (transposed)
        # fft_convolve(x, cumprod(d)) == causal IIR y[t] = d*(x[t] + y[t-1]), computed as a
        # weighted Hillis-Steele doubling scan over frames: rolls hit the XLU, muls the VPU;
        # wrapped-around rows are zeroed by the precomputed mask baked into the coefficients.
        y = x * scan_ref[base]                                            # y_0 = d * x
        for k in range(n_scan):                                           # static, log2(F) steps
            y = y + scan_ref[base + 1 + k] * pltpu.roll(y, 1 << k, axis=0)
        x2 = jnp.dot(y, w2_ref[i], preferred_element_type=jnp.float32) + x
        cp_new = jnp.tanh(x2 * g_ref[i])                                  # (F, LPC)
        acc = acc + jnp.dot(cp_new, aud_ref[i],
                            preferred_element_type=jnp.float32)           # mix folded in
        return cp_new, acc

    init = (cp_ref[0], jnp.zeros((F, LPC), jnp.float32))
    _, acc = lax.fori_loop(0, n_blocks, body, init, unroll=True)
    out_ref[0] = acc                                                      # single dense store


def _lane_pack_factor(batch: int, channels: int) -> int:
    """Largest divisor of `batch` whose packed lane width (lp*channels) fits 128 lanes.

    Note: on v7x (2 TensorCores) prefer the largest such divisor <= batch // 2 so the
    "parallel" grid keeps >= 2 balanced steps; on v5e/v6e (1 TC) packing everything is best.
    """
    lp = 1
    for cand in range(1, batch + 1):
        if batch % cand == 0 and cand * channels <= 128:
            lp = cand
    return lp


def stack_forward(cp, params, *, base_resonance=0.5, max_gain=5.0):
    cp = cp.astype(jnp.float32)
    B, C, F = cp.shape
    w1 = params["w1"].astype(jnp.float32)
    w2 = params["w2"].astype(jnp.float32)
    aud = params["audio"].astype(jnp.float32)
    n_blocks = w1.shape[0]
    span = 1.0 - base_resonance

    lp = _lane_pack_factor(B, C)
    G = B // lp
    LPC = lp * C
    K = (F - 1).bit_length()                                  # ceil(log2(F)), 0 if F == 1

    # ---- tiny per-block parameter math stays in the wrapper -----------------------------
    d = base_resonance + jax.nn.sigmoid(params["decays"].astype(jnp.float32)) * span   # (NB, C)
    g = jax.nn.sigmoid(params["gains"].astype(jnp.float32)) * max_gain                 # (NB, C)
    mixw = jax.nn.softmax(params["mix"].astype(jnp.float32))                           # (NB,)

    # Doubling-scan coefficients: step 0 gives y = d*x, step k adds d^{2^k} * y[t - 2^k];
    # the mask (f >= 2^k) kills the roll wrap-around.  No d^{-t} powers -> no range hazard.
    t = jnp.arange(F, dtype=jnp.float32)
    coefs = [jnp.broadcast_to(d[:, None, :], (n_blocks, F, C))]
    for k in range(K):
        s = 1 << k
        mask = (t >= s).astype(jnp.float32)                               # (F,)
        coefs.append((d ** s)[:, None, :] * mask[None, :, None])          # (NB, F, C)
    scan = jnp.stack(coefs, axis=1).reshape(n_blocks * (K + 1), F, C)     # (NB*(K+1), F, C)
    scan = jnp.tile(scan, (1, 1, lp))                                     # lane-tile -> LPC
    g_t = jnp.tile(g, (1, lp))[:, None, :]                                # (NB, 1, LPC)

    # ---- channels-on-lanes layout, `lp` batches packed along lanes -----------------------
    # Weights become block-diagonal (LPC, LPC) so one matmul serves all packed batches;
    # softmax(mix) is folded into the audio map so it never enters the kernel.
    eye = jnp.eye(lp, dtype=jnp.float32)
    w1t = jnp.transpose(w1, (0, 2, 1))
    w2t = jnp.transpose(w2, (0, 2, 1))
    audt = jnp.transpose(aud, (0, 2, 1)) * mixw[:, None, None]
    w1bd = jnp.einsum("pq,idc->ipdqc", eye, w1t).reshape(n_blocks, LPC, LPC)
    w2bd = jnp.einsum("pq,idc->ipdqc", eye, w2t).reshape(n_blocks, LPC, LPC)
    audbd = jnp.einsum("pq,idc->ipdqc", eye, audt).reshape(n_blocks, LPC, LPC)

    cpt = jnp.transpose(cp, (0, 2, 1))                                    # (B, F, C)
    cpp = cpt.reshape(G, lp, F, C).transpose(0, 2, 1, 3).reshape(G, F, LPC)

    # Note: operands stay f32 — this kernel is latency-bound (MXU <1% busy), and bf16
    # matmuls through four chained tanh blocks would not hold the 2e-3 tolerance.
    out = pl.pallas_call(
        _stack_kernel,
        out_shape=jax.ShapeDtypeStruct((G, F, LPC), jnp.float32),
        grid_spec=pltpu.PrefetchScalarGridSpec(
            num_scalar_prefetch=0,
            grid=(G,),
            in_specs=[
                pl.BlockSpec((1, F, LPC), lambda b: (b, 0, 0)),                    # control plane
                pl.BlockSpec((n_blocks, LPC, LPC), lambda b: (0, 0, 0)),           # block-diag w1^T
                pl.BlockSpec((n_blocks, LPC, LPC), lambda b: (0, 0, 0)),           # block-diag w2^T
                pl.BlockSpec((n_blocks, LPC, LPC), lambda b: (0, 0, 0)),           # block-diag audio^T
                pl.BlockSpec((n_blocks * (K + 1), F, LPC), lambda b: (0, 0, 0)),   # scan coefficients
                pl.BlockSpec((n_blocks, 1, LPC), lambda b: (0, 0, 0)),             # gains
            ],
            out_specs=pl.BlockSpec((1, F, LPC), lambda b: (b, 0, 0)),
        ),
        compiler_params=pltpu.CompilerParams(
            dimension_semantics=("parallel",)),
    )(cpp, w1bd, w2bd, audbd, scan, g_t)

    # Unpack lanes -> (B, F, C); row-major flatten == audio.permute(0, 2, 1).reshape(B,1,F*C)
    out = out.reshape(G, F, lp, C).transpose(0, 2, 1, 3)
    return out.reshape(B, 1, F * C)


def ref_stack(cp, params, *, base_resonance=0.5, max_gain=5.0):
    """Pure-JAX reference matching run_layer / Block / Stack semantics."""
    cp = cp.astype(jnp.float32)
    B, C, F = cp.shape
    w1s, w2s, auds = params["w1"], params["w2"], params["audio"]
    n_blocks = w1s.shape[0]
    span = 1.0 - base_resonance
    mixw = jax.nn.softmax(params["mix"].astype(jnp.float32))

    working = cp
    chans = []
    for i in range(n_blocks):
        d = base_resonance + jax.nn.sigmoid(params["decays"][i]) * span   # (C,)
        g = jax.nn.sigmoid(params["gains"][i]) * max_gain                 # (C,)
        x = jnp.einsum("cd,bdf->bcf", w1s[i], working)
        orig = x
        dcum = jnp.cumprod(jnp.broadcast_to(d[None, :, None], (B, C, F)), axis=-1)
        # causal linear convolution (fft_convolve truncated to the first F samples)
        xc = jnp.zeros_like(x)
        for tt in range(F):
            acc = jnp.zeros((B, C), jnp.float32)
            for j in range(tt + 1):
                acc = acc + x[:, :, tt - j] * dcum[:, :, j]
            xc = xc.at[:, :, tt].set(acc)
        x2 = jnp.einsum("cd,bdf->bcf", w2s[i], xc) + orig
        cp_new = jnp.tanh(x2 * g[None, :, None])
        audio = jnp.einsum("cd,bdf->bcf", auds[i], cp_new)
        audio = jnp.transpose(audio, (0, 2, 1)).reshape(B, F * C)
        chans.append(audio)
        working = cp_new
    channels = jnp.stack(chans, axis=1)                      # (B, n_blocks, total)
    return jnp.einsum("bnt,n->bt", channels, mixw).reshape(B, 1, F * C)


if __name__ == "__main__":
    B, C, F = 2, 32, 8          # batch, block_size (control-plane channels), frames
    n_blocks = 4
    base_resonance, max_gain = 0.5, 5.0

    key = jax.random.PRNGKey(0)
    k_cp, k_w1, k_w2, k_aud, k_dec, k_gain, k_mix = jax.random.split(key, 7)

    params = {
        "w1": jax.random.uniform(k_w1, (n_blocks, C, C), jnp.float32, -1.0, 1.0),
        "w2": jax.random.uniform(k_w2, (n_blocks, C, C), jnp.float32, -1.0, 1.0),
        "audio": jax.random.uniform(k_aud, (n_blocks, C, C), jnp.float32, -1.0, 1.0),
        "decays": jax.random.uniform(k_dec, (n_blocks, C), jnp.float32, 0.001, 0.99),
        "gains": jax.random.uniform(k_gain, (n_blocks, C), jnp.float32, 0.0, 1.0),
        "mix": jax.random.uniform(k_mix, (n_blocks,), jnp.float32, -1.0, 1.0),
    }
    cp = jax.random.normal(k_cp, (B, C, F), jnp.float32)

    mixed = jax.block_until_ready(
        stack_forward(cp, params, base_resonance=base_resonance, max_gain=max_gain))
    ref = jax.block_until_ready(
        ref_stack(cp, params, base_resonance=base_resonance, max_gain=max_gain))

    assert mixed.shape == (B, 1, F * C), mixed.shape
    err = float(jnp.max(jnp.abs(mixed - ref)))
    assert jnp.allclose(mixed, ref, rtol=2e-3, atol=2e-3), err
    print("KERNEL_OK")
</pallas_src>

<mosaic_0001>
module attributes {stable_mosaic.version = 11 : i64} {
  func.func @_stack_kernel(%arg0: i32, %arg1: memref<1x8x64xf32, #tpu.memory_space<vmem>>, %arg2: memref<4x64x64xf32, #tpu.memory_space<vmem>>, %arg3: memref<4x64x64xf32, #tpu.memory_space<vmem>>, %arg4: memref<4x64x64xf32, #tpu.memory_space<vmem>>, %arg5: memref<16x8x64xf32, #tpu.memory_space<vmem>>, %arg6: memref<4x1x64xf32, #tpu.memory_space<vmem>>, %arg7: memref<1x8x64xf32, #tpu.memory_space<vmem>>) attributes {dimension_semantics = [#tpu.dimension_semantics<parallel>], iteration_bounds = array<i64: 1>, scalar_prefetch = 0 : i64, scratch_operands = 0 : i64, tpu.core_type = #tpu.core_type<tc>, window_params = [{transform_indices = @transform_0, window_bounds = array<i64: 1, 8, 64>}, {pipeline_mode = #tpu.pipeline_mode<synchronous>, transform_indices = @transform_1, window_bounds = array<i64: 4, 64, 64>}, {pipeline_mode = #tpu.pipeline_mode<synchronous>, transform_indices = @transform_2, window_bounds = array<i64: 4, 64, 64>}, {pipeline_mode = #tpu.pipeline_mode<synchronous>, transform_indices = @transform_3, window_bounds = array<i64: 4, 64, 64>}, {pipeline_mode = #tpu.pipeline_mode<synchronous>, transform_indices = @transform_4, window_bounds = array<i64: 16, 8, 64>}, {pipeline_mode = #tpu.pipeline_mode<synchronous>, transform_indices = @transform_5, window_bounds = array<i64: 4, 1, 64>}, {transform_indices = @transform_6, window_bounds = array<i64: 1, 8, 64>}]} {
    %c0 = arith.constant 0 : index
    %c0_0 = arith.constant 0 : index
    %c0_1 = arith.constant 0 : index
    %0 = vector.load %arg1[%c0, %c0_0, %c0_1] : memref<1x8x64xf32, #tpu.memory_space<vmem>>, vector<1x8x64xf32>
    %1 = vector.shape_cast %0 : vector<1x8x64xf32> to vector<8x64xf32>
    %cst = arith.constant 0.000000e+00 : f32
    %2 = vector.broadcast %cst : f32 to vector<8x64xf32>
    %c0_i32 = arith.constant 0 : i32
    %c4_i32 = arith.constant 4 : i32
    %3 = arith.muli %c0_i32, %c4_i32 : i32
    %4 = arith.index_cast %c0_i32 : i32 to index
    %c0_2 = arith.constant 0 : index
    %c0_3 = arith.constant 0 : index
    %5 = vector.load %arg2[%4, %c0_2, %c0_3] : memref<4x64x64xf32, #tpu.memory_space<vmem>>, vector<1x64x64xf32>
    %6 = vector.shape_cast %5 : vector<1x64x64xf32> to vector<64x64xf32>
    %cst_4 = arith.constant dense<0.000000e+00> : vector<8x64xf32>
    %7 = tpu.matmul %1, %6, %cst_4 {dimension_numbers = #tpu.dot_dimension_numbers<[1], [0], [0], [1], [0, 0, 1, 1], [], []>} : vector<8x64xf32>, vector<64x64xf32>, vector<8x64xf32> -> vector<8x64xf32>
    %8 = arith.index_cast %3 : i32 to index
    %c0_5 = arith.constant 0 : index
    %c0_6 = arith.constant 0 : index
    %9 = vector.load %arg5[%8, %c0_5, %c0_6] : memref<16x8x64xf32, #tpu.memory_space<vmem>>, vector<1x8x64xf32>
    %10 = vector.shape_cast %9 : vector<1x8x64xf32> to vector<8x64xf32>
    %11 = arith.mulf %7, %10 : vector<8x64xf32>
    %c1_i32 = arith.constant 1 : i32
    %12 = arith.addi %3, %c1_i32 : i32
    %c0_i32_7 = arith.constant 0 : i32
    %13 = arith.addi %12, %c0_i32_7 : i32
    %14 = arith.index_cast %13 : i32 to index
    %c0_8 = arith.constant 0 : index
    %c0_9 = arith.constant 0 : index
    %15 = vector.load %arg5[%14, %c0_8, %c0_9] : memref<16x8x64xf32, #tpu.memory_space<vmem>>, vector<1x8x64xf32>
    %16 = vector.shape_cast %15 : vector<1x8x64xf32> to vector<8x64xf32>
    %c1_i32_10 = arith.constant 1 : i32
    %17 = tpu.dynamic_rotate %11 by %c1_i32_10 dim 0 : vector<8x64xf32>, i32 -> vector<8x64xf32>
    %18 = arith.mulf %16, %17 : vector<8x64xf32>
    %19 = arith.addf %11, %18 : vector<8x64xf32>
    %c1_i32_11 = arith.constant 1 : i32
    %20 = arith.addi %3, %c1_i32_11 : i32
    %c1_i32_12 = arith.constant 1 : i32
    %21 = arith.addi %20, %c1_i32_12 : i32
    %22 = arith.index_cast %21 : i32 to index
    %c0_13 = arith.constant 0 : index
    %c0_14 = arith.constant 0 : index
    %23 = vector.load %arg5[%22, %c0_13, %c0_14] : memref<16x8x64xf32, #tpu.memory_space<vmem>>, vector<1x8x64xf32>
    %24 = vector.shape_cast %23 : vector<1x8x64xf32> to vector<8x64xf32>
    %c2_i32 = arith.constant 2 : i32
    %25 = tpu.dynamic_rotate %19 by %c2_i32 dim 0 : vector<8x64xf32>, i32 -> vector<8x64xf32>
    %26 = arith.mulf %24, %25 : vector<8x64xf32>
    %27 = arith.addf %19, %26 : vector<8x64xf32>
    %c1_i32_15 = arith.constant 1 : i32
    %28 = arith.addi %3, %c1_i32_15 : i32
    %c2_i32_16 = arith.constant 2 : i32
    %29 = arith.addi %28, %c2_i32_16 : i32
    %30 = arith.index_cast %29 : i32 to index
    %c0_17 = arith.constant 0 : index
    %c0_18 = arith.constant 0 : index
    %31 = vector.load %arg5[%30, %c0_17, %c0_18] : memref<16x8x64xf32, #tpu.memory_space<vmem>>, vector<1x8x64xf32>
    %32 = vector.shape_cast %31 : vector<1x8x64xf32> to vector<8x64xf32>
    %c4_i32_19 = arith.constant 4 : i32
    %33 = tpu.dynamic_rotate %27 by %c4_i32_19 dim 0 : vector<8x64xf32>, i32 -> vector<8x64xf32>
    %34 = arith.mulf %32, %33 : vector<8x64xf32>
    %35 = arith.addf %27, %34 : vector<8x64xf32>
    %36 = arith.index_cast %c0_i32 : i32 to index
    %c0_20 = arith.constant 0 : index
    %c0_21 = arith.constant 0 : index
    %37 = vector.load %arg3[%36, %c0_20, %c0_21] : memref<4x64x64xf32, #tpu.memory_space<vmem>>, vector<1x64x64xf32>
    %38 = vector.shape_cast %37 : vector<1x64x64xf32> to vector<64x64xf32>
    %cst_22 = arith.constant dense<0.000000e+00> : vector<8x64xf32>
    %39 = tpu.matmul %35, %38, %cst_22 {dimension_numbers = #tpu.dot_dimension_numbers<[1], [0], [0], [1], [0, 0, 1, 1], [], []>} : vector<8x64xf32>, vector<64x64xf32>, vector<8x64xf32> -> vector<8x64xf32>
    %40 = arith.addf %39, %7 : vector<8x64xf32>
    %41 = arith.index_cast %c0_i32 : i32 to index
    %c0_23 = arith.constant 0 : index
    %c0_24 = arith.constant 0 : index
    %42 = vector.load %arg6[%41, %c0_23, %c0_24] : memref<4x1x64xf32, #tpu.memory_space<vmem>>, vector<1x1x64xf32>
    %43 = vector.shape_cast %42 : vector<1x1x64xf32> to vector<1x64xf32>
    %44 = vector.broadcast %43 : vector<1x64xf32> to vector<8x64xf32>
    %45 = arith.mulf %40, %44 : vector<8x64xf32>
    %46 = math.tanh %45 : vector<8x64xf32>
    %47 = arith.index_cast %c0_i32 : i32 to index
    %c0_25 = arith.constant 0 : index
    %c0_26 = arith.constant 0 : index
    %48 = vector.load %arg4[%47, %c0_25, %c0_26] : memref<4x64x64xf32, #tpu.memory_space<vmem>>, vector<1x64x64xf32>
    %49 = vector.shape_cast %48 : vector<1x64x64xf32> to vector<64x64xf32>
    %cst_27 = arith.constant dense<0.000000e+00> : vector<8x64xf32>
    %50 = tpu.matmul %46, %49, %cst_27 {dimension_numbers = #tpu.dot_dimension_numbers<[1], [0], [0], [1], [0, 0, 1, 1], [], []>} : vector<8x64xf32>, vector<64x64xf32>, vector<8x64xf32> -> vector<8x64xf32>
    %51 = arith.addf %2, %50 : vector<8x64xf32>
    %c1_i32_28 = arith.constant 1 : i32
    %c4_i32_29 = arith.constant 4 : i32
    %52 = arith.muli %c1_i32_28, %c4_i32_29 : i32
    %53 = arith.index_cast %c1_i32_28 : i32 to index
    %c0_30 = arith.constant 0 : index
    %c0_31 = arith.constant 0 : index
    %54 = vector.load %arg2[%53, %c0_30, %c0_31] : memref<4x64x64xf32, #tpu.memory_space<vmem>>, vector<1x64x64xf32>
    %55 = vector.shape_cast %54 : vector<1x64x64xf32> to vector<64x64xf32>
    %cst_32 = arith.constant dense<0.000000e+00> : vector<8x64xf32>
    %56 = tpu.matmul %46, %55, %cst_32 {dimension_numbers = #tpu.dot_dimension_numbers<[1], [0], [0], [1], [0, 0, 1, 1], [], []>} : vector<8x64xf32>, vector<64x64xf32>, vector<8x64xf32> -> vector<8x64xf32>
    %57 = arith.index_cast %52 : i32 to index
    %c0_33 = arith.constant 0 : index
    %c0_34 = arith.constant 0 : index
    %58 = vector.load %arg5[%57, %c0_33, %c0_34] : memref<16x8x64xf32, #tpu.memory_space<vmem>>, vector<1x8x64xf32>
    %59 = vector.shape_cast %58 : vector<1x8x64xf32> to vector<8x64xf32>
    %60 = arith.mulf %56, %59 : vector<8x64xf32>
    %c1_i32_35 = arith.constant 1 : i32
    %61 = arith.addi %52, %c1_i32_35 : i32
    %c0_i32_36 = arith.constant 0 : i32
    %62 = arith.addi %61, %c0_i32_36 : i32
    %63 = arith.index_cast %62 : i32 to index
    %c0_37 = arith.constant 0 : index
    %c0_38 = arith.constant 0 : index
    %64 = vector.load %arg5[%63, %c0_37, %c0_38] : memref<16x8x64xf32, #tpu.memory_space<vmem>>, vector<1x8x64xf32>
    %65 = vector.shape_cast %64 : vector<1x8x64xf32> to vector<8x64xf32>
    %c1_i32_39 = arith.constant 1 : i32
    %66 = tpu.dynamic_rotate %60 by %c1_i32_39 dim 0 : vector<8x64xf32>, i32 -> vector<8x64xf32>
    %67 = arith.mulf %65, %66 : vector<8x64xf32>
    %68 = arith.addf %60, %67 : vector<8x64xf32>
    %c1_i32_40 = arith.constant 1 : i32
    %69 = arith.addi %52, %c1_i32_40 : i32
    %c1_i32_41 = arith.constant 1 : i32
    %70 = arith.addi %69, %c1_i32_41 : i32
    %71 = arith.index_cast %70 : i32 to index
    %c0_42 = arith.constant 0 : index
    %c0_43 = arith.constant 0 : index
    %72 = vector.load %arg5[%71, %c0_42, %c0_43] : memref<16x8x64xf32, #tpu.memory_space<vmem>>, vector<1x8x64xf32>
    %73 = vector.shape_cast %72 : vector<1x8x64xf32> to vector<8x64xf32>
    %c2_i32_44 = arith.constant 2 : i32
    %74 = tpu.dynamic_rotate %68 by %c2_i32_44 dim 0 : vector<8x64xf32>, i32 -> vector<8x64xf32>
    %75 = arith.mulf %73, %74 : vector<8x64xf32>
    %76 = arith.addf %68, %75 : vector<8x64xf32>
    %c1_i32_45 = arith.constant 1 : i32
    %77 = arith.addi %52, %c1_i32_45 : i32
    %c2_i32_46 = arith.constant 2 : i32
    %78 = arith.addi %77, %c2_i32_46 : i32
    %79 = arith.index_cast %78 : i32 to index
    %c0_47 = arith.constant 0 : index
    %c0_48 = arith.constant 0 : index
    %80 = vector.load %arg5[%79, %c0_47, %c0_48] : memref<16x8x64xf32, #tpu.memory_space<vmem>>, vector<1x8x64xf32>
    %81 = vector.shape_cast %80 : vector<1x8x64xf32> to vector<8x64xf32>
    %c4_i32_49 = arith.constant 4 : i32
    %82 = tpu.dynamic_rotate %76 by %c4_i32_49 dim 0 : vector<8x64xf32>, i32 -> vector<8x64xf32>
    %83 = arith.mulf %81, %82 : vector<8x64xf32>
    %84 = arith.addf %76, %83 : vector<8x64xf32>
    %85 = arith.index_cast %c1_i32_28 : i32 to index
    %c0_50 = arith.constant 0 : index
    %c0_51 = arith.constant 0 : index
    %86 = vector.load %arg3[%85, %c0_50, %c0_51] : memref<4x64x64xf32, #tpu.memory_space<vmem>>, vector<1x64x64xf32>
    %87 = vector.shape_cast %86 : vector<1x64x64xf32> to vector<64x64xf32>
    %cst_52 = arith.constant dense<0.000000e+00> : vector<8x64xf32>
    %88 = tpu.matmul %84, %87, %cst_52 {dimension_numbers = #tpu.dot_dimension_numbers<[1], [0], [0], [1], [0, 0, 1, 1], [], []>} : vector<8x64xf32>, vector<64x64xf32>, vector<8x64xf32> -> vector<8x64xf32>
    %89 = arith.addf %88, %56 : vector<8x64xf32>
    %90 = arith.index_cast %c1_i32_28 : i32 to index
    %c0_53 = arith.constant 0 : index
    %c0_54 = arith.constant 0 : index
    %91 = vector.load %arg6[%90, %c0_53, %c0_54] : memref<4x1x64xf32, #tpu.memory_space<vmem>>, vector<1x1x64xf32>
    %92 = vector.shape_cast %91 : vector<1x1x64xf32> to vector<1x64xf32>
    %93 = vector.broadcast %92 : vector<1x64xf32> to vector<8x64xf32>
    %94 = arith.mulf %89, %93 : vector<8x64xf32>
    %95 = math.tanh %94 : vector<8x64xf32>
    %96 = arith.index_cast %c1_i32_28 : i32 to index
    %c0_55 = arith.constant 0 : index
    %c0_56 = arith.constant 0 : index
    %97 = vector.load %arg4[%96, %c0_55, %c0_56] : memref<4x64x64xf32, #tpu.memory_space<vmem>>, vector<1x64x64xf32>
    %98 = vector.shape_cast %97 : vector<1x64x64xf32> to vector<64x64xf32>
    %cst_57 = arith.constant dense<0.000000e+00> : vector<8x64xf32>
    %99 = tpu.matmul %95, %98, %cst_57 {dimension_numbers = #tpu.dot_dimension_numbers<[1], [0], [0], [1], [0, 0, 1, 1], [], []>} : vector<8x64xf32>, vector<64x64xf32>, vector<8x64xf32> -> vector<8x64xf32>
    %100 = arith.addf %51, %99 : vector<8x64xf32>
    %c2_i32_58 = arith.constant 2 : i32
    %c4_i32_59 = arith.constant 4 : i32
    %101 = arith.muli %c2_i32_58, %c4_i32_59 : i32
    %102 = arith.index_cast %c2_i32_58 : i32 to index
    %c0_60 = arith.constant 0 : index
    %c0_61 = arith.constant 0 : index
    %103 = vector.load %arg2[%102, %c0_60, %c0_61] : memref<4x64x64xf32, #tpu.memory_space<vmem>>, vector<1x64x64xf32>
    %104 = vector.shape_cast %103 : vector<1x64x64xf32> to vector<64x64xf32>
    %cst_62 = arith.constant dense<0.000000e+00> : vector<8x64xf32>
    %105 = tpu.matmul %95, %104, %cst_62 {dimension_numbers = #tpu.dot_dimension_numbers<[1], [0], [0], [1], [0, 0, 1, 1], [], []>} : vector<8x64xf32>, vector<64x64xf32>, vector<8x64xf32> -> vector<8x64xf32>
    %106 = arith.index_cast %101 : i32 to index
    %c0_63 = arith.constant 0 : index
    %c0_64 = arith.constant 0 : index
    %107 = vector.load %arg5[%106, %c0_63, %c0_64] : memref<16x8x64xf32, #tpu.memory_space<vmem>>, vector<1x8x64xf32>
    %108 = vector.shape_cast %107 : vector<1x8x64xf32> to vector<8x64xf32>
    %109 = arith.mulf %105, %108 : vector<8x64xf32>
    %c1_i32_65 = arith.constant 1 : i32
    %110 = arith.addi %101, %c1_i32_65 : i32
    %c0_i32_66 = arith.constant 0 : i32
    %111 = arith.addi %110, %c0_i32_66 : i32
    %112 = arith.index_cast %111 : i32 to index
    %c0_67 = arith.constant 0 : index
    %c0_68 = arith.constant 0 : index
    %113 = vector.load %arg5[%112, %c0_67, %c0_68] : memref<16x8x64xf32, #tpu.memory_space<vmem>>, vector<1x8x64xf32>
    %114 = vector.shape_cast %113 : vector<1x8x64xf32> to vector<8x64xf32>
    %c1_i32_69 = arith.constant 1 : i32
    %115 = tpu.dynamic_rotate %109 by %c1_i32_69 dim 0 : vector<8x64xf32>, i32 -> vector<8x64xf32>
    %116 = arith.mulf %114, %115 : vector<8x64xf32>
    %117 = arith.addf %109, %116 : vector<8x64xf32>
    %c1_i32_70 = arith.constant 1 : i32
    %118 = arith.addi %101, %c1_i32_70 : i32
    %c1_i32_71 = arith.constant 1 : i32
    %119 = arith.addi %118, %c1_i32_71 : i32
    %120 = arith.index_cast %119 : i32 to index
    %c0_72 = arith.constant 0 : index
    %c0_73 = arith.constant 0 : index
    %121 = vector.load %arg5[%120, %c0_72, %c0_73] : memref<16x8x64xf32, #tpu.memory_space<vmem>>, vector<1x8x64xf32>
    %122 = vector.shape_cast %121 : vector<1x8x64xf32> to vector<8x64xf32>
    %c2_i32_74 = arith.constant 2 : i32
    %123 = tpu.dynamic_rotate %117 by %c2_i32_74 dim 0 : vector<8x64xf32>, i32 -> vector<8x64xf32>
    %124 = arith.mulf %122, %123 : vector<8x64xf32>
    %125 = arith.addf %117, %124 : vector<8x64xf32>
    %c1_i32_75 = arith.constant 1 : i32
    %126 = arith.addi %101, %c1_i32_75 : i32
    %c2_i32_76 = arith.constant 2 : i32
    %127 = arith.addi %126, %c2_i32_76 : i32
    %128 = arith.index_cast %127 : i32 to index
    %c0_77 = arith.constant 0 : index
    %c0_78 = arith.constant 0 : index
    %129 = vector.load %arg5[%128, %c0_77, %c0_78] : memref<16x8x64xf32, #tpu.memory_space<vmem>>, vector<1x8x64xf32>
    %130 = vector.shape_cast %129 : vector<1x8x64xf32> to vector<8x64xf32>
    %c4_i32_79 = arith.constant 4 : i32
    %131 = tpu.dynamic_rotate %125 by %c4_i32_79 dim 0 : vector<8x64xf32>, i32 -> vector<8x64xf32>
    %132 = arith.mulf %130, %131 : vector<8x64xf32>
    %133 = arith.addf %125, %132 : vector<8x64xf32>
    %134 = arith.index_cast %c2_i32_58 : i32 to index
    %c0_80 = arith.constant 0 : index
    %c0_81 = arith.constant 0 : index
    %135 = vector.load %arg3[%134, %c0_80, %c0_81] : memref<4x64x64xf32, #tpu.memory_space<vmem>>, vector<1x64x64xf32>
    %136 = vector.shape_cast %135 : vector<1x64x64xf32> to vector<64x64xf32>
    %cst_82 = arith.constant dense<0.000000e+00> : vector<8x64xf32>
    %137 = tpu.matmul %133, %136, %cst_82 {dimension_numbers = #tpu.dot_dimension_numbers<[1], [0], [0], [1], [0, 0, 1, 1], [], []>} : vector<8x64xf32>, vector<64x64xf32>, vector<8x64xf32> -> vector<8x64xf32>
    %138 = arith.addf %137, %105 : vector<8x64xf32>
    %139 = arith.index_cast %c2_i32_58 : i32 to index
    %c0_83 = arith.constant 0 : index
    %c0_84 = arith.constant 0 : index
    %140 = vector.load %arg6[%139, %c0_83, %c0_84] : memref<4x1x64xf32, #tpu.memory_space<vmem>>, vector<1x1x64xf32>
    %141 = vector.shape_cast %140 : vector<1x1x64xf32> to vector<1x64xf32>
    %142 = vector.broadcast %141 : vector<1x64xf32> to vector<8x64xf32>
    %143 = arith.mulf %138, %142 : vector<8x64xf32>
    %144 = math.tanh %143 : vector<8x64xf32>
    %145 = arith.index_cast %c2_i32_58 : i32 to index
    %c0_85 = arith.constant 0 : index
    %c0_86 = arith.constant 0 : index
    %146 = vector.load %arg4[%145, %c0_85, %c0_86] : memref<4x64x64xf32, #tpu.memory_space<vmem>>, vector<1x64x64xf32>
    %147 = vector.shape_cast %146 : vector<1x64x64xf32> to vector<64x64xf32>
    %cst_87 = arith.constant dense<0.000000e+00> : vector<8x64xf32>
    %148 = tpu.matmul %144, %147, %cst_87 {dimension_numbers = #tpu.dot_dimension_numbers<[1], [0], [0], [1], [0, 0, 1, 1], [], []>} : vector<8x64xf32>, vector<64x64xf32>, vector<8x64xf32> -> vector<8x64xf32>
    %149 = arith.addf %100, %148 : vector<8x64xf32>
    %c3_i32 = arith.constant 3 : i32
    %c4_i32_88 = arith.constant 4 : i32
    %150 = arith.muli %c3_i32, %c4_i32_88 : i32
    %151 = arith.index_cast %c3_i32 : i32 to index
    %c0_89 = arith.constant 0 : index
    %c0_90 = arith.constant 0 : index
    %152 = vector.load %arg2[%151, %c0_89, %c0_90] : memref<4x64x64xf32, #tpu.memory_space<vmem>>, vector<1x64x64xf32>
    %153 = vector.shape_cast %152 : vector<1x64x64xf32> to vector<64x64xf32>
    %cst_91 = arith.constant dense<0.000000e+00> : vector<8x64xf32>
    %154 = tpu.matmul %144, %153, %cst_91 {dimension_numbers = #tpu.dot_dimension_numbers<[1], [0], [0], [1], [0, 0, 1, 1], [], []>} : vector<8x64xf32>, vector<64x64xf32>, vector<8x64xf32> -> vector<8x64xf32>
    %155 = arith.index_cast %150 : i32 to index
    %c0_92 = arith.constant 0 : index
    %c0_93 = arith.constant 0 : index
    %156 = vector.load %arg5[%155, %c0_92, %c0_93] : memref<16x8x64xf32, #tpu.memory_space<vmem>>, vector<1x8x64xf32>
    %157 = vector.shape_cast %156 : vector<1x8x64xf32> to vector<8x64xf32>
    %158 = arith.mulf %154, %157 : vector<8x64xf32>
    %c1_i32_94 = arith.constant 1 : i32
    %159 = arith.addi %150, %c1_i32_94 : i32
    %c0_i32_95 = arith.constant 0 : i32
    %160 = arith.addi %159, %c0_i32_95 : i32
    %161 = arith.index_cast %160 : i32 to index
    %c0_96 = arith.constant 0 : index
    %c0_97 = arith.constant 0 : index
    %162 = vector.load %arg5[%161, %c0_96, %c0_97] : memref<16x8x64xf32, #tpu.memory_space<vmem>>, vector<1x8x64xf32>
    %163 = vector.shape_cast %162 : vector<1x8x64xf32> to vector<8x64xf32>
    %c1_i32_98 = arith.constant 1 : i32
    %164 = tpu.dynamic_rotate %158 by %c1_i32_98 dim 0 : vector<8x64xf32>, i32 -> vector<8x64xf32>
    %165 = arith.mulf %163, %164 : vector<8x64xf32>
    %166 = arith.addf %158, %165 : vector<8x64xf32>
    %c1_i32_99 = arith.constant 1 : i32
    %167 = arith.addi %150, %c1_i32_99 : i32
    %c1_i32_100 = arith.constant 1 : i32
    %168 = arith.addi %167, %c1_i32_100 : i32
    %169 = arith.index_cast %168 : i32 to index
    %c0_101 = arith.constant 0 : index
    %c0_102 = arith.constant 0 : index
    %170 = vector.load %arg5[%169, %c0_101, %c0_102] : memref<16x8x64xf32, #tpu.memory_space<vmem>>, vector<1x8x64xf32>
    %171 = vector.shape_cast %170 : vector<1x8x64xf32> to vector<8x64xf32>
    %c2_i32_103 = arith.constant 2 : i32
    %172 = tpu.dynamic_rotate %166 by %c2_i32_103 dim 0 : vector<8x64xf32>, i32 -> vector<8x64xf32>
    %173 = arith.mulf %171, %172 : vector<8x64xf32>
    %174 = arith.addf %166, %173 : vector<8x64xf32>
    %c1_i32_104 = arith.constant 1 : i32
    %175 = arith.addi %150, %c1_i32_104 : i32
    %c2_i32_105 = arith.constant 2 : i32
    %176 = arith.addi %175, %c2_i32_105 : i32
    %177 = arith.index_cast %176 : i32 to index
    %c0_106 = arith.constant 0 : index
    %c0_107 = arith.constant 0 : index
    %178 = vector.load %arg5[%177, %c0_106, %c0_107] : memref<16x8x64xf32, #tpu.memory_space<vmem>>, vector<1x8x64xf32>
    %179 = vector.shape_cast %178 : vector<1x8x64xf32> to vector<8x64xf32>
    %c4_i32_108 = arith.constant 4 : i32
    %180 = tpu.dynamic_rotate %174 by %c4_i32_108 dim 0 : vector<8x64xf32>, i32 -> vector<8x64xf32>
    %181 = arith.mulf %179, %180 : vector<8x64xf32>
    %182 = arith.addf %174, %181 : vector<8x64xf32>
    %183 = arith.index_cast %c3_i32 : i32 to index
    %c0_109 = arith.constant 0 : index
    %c0_110 = arith.constant 0 : index
    %184 = vector.load %arg3[%183, %c0_109, %c0_110] : memref<4x64x64xf32, #tpu.memory_space<vmem>>, vector<1x64x64xf32>
    %185 = vector.shape_cast %184 : vector<1x64x64xf32> to vector<64x64xf32>
    %cst_111 = arith.constant dense<0.000000e+00> : vector<8x64xf32>
    %186 = tpu.matmul %182, %185, %cst_111 {dimension_numbers = #tpu.dot_dimension_numbers<[1], [0], [0], [1], [0, 0, 1, 1], [], []>} : vector<8x64xf32>, vector<64x64xf32>, vector<8x64xf32> -> vector<8x64xf32>
    %187 = arith.addf %186, %154 : vector<8x64xf32>
    %188 = arith.index_cast %c3_i32 : i32 to index
    %c0_112 = arith.constant 0 : index
    %c0_113 = arith.constant 0 : index
    %189 = vector.load %arg6[%188, %c0_112, %c0_113] : memref<4x1x64xf32, #tpu.memory_space<vmem>>, vector<1x1x64xf32>
    %190 = vector.shape_cast %189 : vector<1x1x64xf32> to vector<1x64xf32>
    %191 = vector.broadcast %190 : vector<1x64xf32> to vector<8x64xf32>
    %192 = arith.mulf %187, %191 : vector<8x64xf32>
    %193 = math.tanh %192 : vector<8x64xf32>
    %194 = arith.index_cast %c3_i32 : i32 to index
    %c0_114 = arith.constant 0 : index
    %c0_115 = arith.constant 0 : index
    %195 = vector.load %arg4[%194, %c0_114, %c0_115] : memref<4x64x64xf32, #tpu.memory_space<vmem>>, vector<1x64x64xf32>
    %196 = vector.shape_cast %195 : vector<1x64x64xf32> to vector<64x64xf32>
    %cst_116 = arith.constant dense<0.000000e+00> : vector<8x64xf32>
    %197 = tpu.matmul %193, %196, %cst_116 {dimension_numbers = #tpu.dot_dimension_numbers<[1], [0], [0], [1], [0, 0, 1, 1], [], []>} : vector<8x64xf32>, vector<64x64xf32>, vector<8x64xf32> -> vector<8x64xf32>
    %198 = arith.addf %149, %197 : vector<8x64xf32>
    %c4_i32_117 = arith.constant 4 : i32
    %c0_118 = arith.constant 0 : index
    %c0_119 = arith.constant 0 : index
    %c0_120 = arith.constant 0 : index
    %199 = vector.load %arg7[%c0_118, %c0_119, %c0_120] : memref<1x8x64xf32, #tpu.memory_space<vmem>>, vector<1x8x64xf32>
    %200 = vector.shape_cast %199 : vector<1x8x64xf32> to vector<8x64xf32>
    %201 = vector.shape_cast %198 : vector<8x64xf32> to vector<1x8x64xf32>
    tpu.vector_store %arg7[%c0_118, %c0_119, %c0_120], %201 {strides = array<i32>} : memref<1x8x64xf32, #tpu.memory_space<vmem>>, vector<1x8x64xf32>,
    return
  }
  func.func @transform_0(%arg0: i32) -> (i32, i32, i32) {
    %c0_i32 = arith.constant 0 : i32
    %c0_i32_0 = arith.constant 0 : i32
    %c0_i32_1 = arith.constant 0 : i32
    return %arg0, %c0_i32, %c0_i32_0 : i32, i32, i32
  }
  func.func @transform_1(%arg0: i32) -> (i32, i32, i32) {
    %c0_i32 = arith.constant 0 : i32
    %c0_i32_0 = arith.constant 0 : i32
    %c0_i32_1 = arith.constant 0 : i32
    %c0_i32_2 = arith.constant 0 : i32
    return %c0_i32, %c0_i32_0, %c0_i32_1 : i32, i32, i32
  }
  func.func @transform_2(%arg0: i32) -> (i32, i32, i32) {
    %c0_i32 = arith.constant 0 : i32
    %c0_i32_0 = arith.constant 0 : i32
    %c0_i32_1 = arith.constant 0 : i32
    %c0_i32_2 = arith.constant 0 : i32
    return %c0_i32, %c0_i32_0, %c0_i32_1 : i32, i32, i32
  }
  func.func @transform_3(%arg0: i32) -> (i32, i32, i32) {
    %c0_i32 = arith.constant 0 : i32
    %c0_i32_0 = arith.constant 0 : i32
    %c0_i32_1 = arith.constant 0 : i32
    %c0_i32_2 = arith.constant 0 : i32
    return %c0_i32, %c0_i32_0, %c0_i32_1 : i32, i32, i32
  }
  func.func @transform_4(%arg0: i32) -> (i32, i32, i32) {
    %c0_i32 = arith.constant 0 : i32
    %c0_i32_0 = arith.constant 0 : i32
    %c0_i32_1 = arith.constant 0 : i32
    %c0_i32_2 = arith.constant 0 : i32
    return %c0_i32, %c0_i32_0, %c0_i32_1 : i32, i32, i32
  }
  func.func @transform_5(%arg0: i32) -> (i32, i32, i32) {
    %c0_i32 = arith.constant 0 : i32
    %c0_i32_0 = arith.constant 0 : i32
    %c0_i32_1 = arith.constant 0 : i32
    %c0_i32_2 = arith.constant 0 : i32
    return %c0_i32, %c0_i32_0, %c0_i32_1 : i32, i32, i32
  }
  func.func @transform_6(%arg0: i32) -> (i32, i32, i32) {
    %c0_i32 = arith.constant 0 : i32
    %c0_i32_0 = arith.constant 0 : i32
    %c0_i32_1 = arith.constant 0 : i32
    return %arg0, %c0_i32, %c0_i32_0 : i32, i32, i32
  }
}

</mosaic_0001>

<llo_original>
// kernel: tpu_custom_call.1
$region0: #{tpu_custom_call.1}
  #allocation0 [shape = 'u32[]', space=smem, size = 0x4, offset = 0x4, fixed_abs, tag = 'smem constant byte address 0x4 - core index']
  #allocation1 [shape = 'u32[72,128]{1,0:T(1,128)}', space=vmem, size = 0x9000, scoped, tag = 'internal scratch']
  %s0 = inlined_call_operand.hbm [shape: f32[1,8,64], index: 0, kind: input, shape index: {}]
  %s1 = inlined_call_operand.hbm [shape: f32[4,64,64], index: 1, kind: input, shape index: {}]
  %s2 = inlined_call_operand.hbm [shape: f32[4,64,64], index: 2, kind: input, shape index: {}]
  %s3 = inlined_call_operand.hbm [shape: f32[4,64,64], index: 3, kind: input, shape index: {}]
  %s4 = inlined_call_operand.hbm [shape: f32[16,8,64], index: 4, kind: input, shape index: {}]
  %s5 = inlined_call_operand.vmem [shape: f32[4,1,64], index: 5, kind: input, shape index: {}]
  %s6 = inlined_call_operand.hbm [shape: f32[1,8,64], index: 6, kind: output, shape index: {}]
  %s7 = sld [smem:[#allocation0]]
  $region54: #{tpu_custom_call.1} parent=0
    _
  %s9 = ssub.s32 1, %s7
  %s10 = scalar_select 0, %s9, %s7
  $region1: #{tpu_custom_call.1} parent=0
    #allocation2 [shape = 'u8[4096]{0}', space=vmem, size = 0x1000, scoped, tag = 'input window, operand 0, single buffered']
    #allocation3 [shape = 's32[1]{0}', space=sflag, size = 0x4, scoped, tag = 'scoped memory for tpu_custom_call.1']
    #allocation4 [shape = 's32[1]{0}', space=sflag, size = 0x4, scoped, tag = 'scoped memory for tpu_custom_call.1']
    #allocation5 [shape = 'u8[131072]{0}', space=vmem, size = 0x20000, scoped, tag = 'input window, operand 1, single buffered']
    #allocation6 [shape = 's32[1]{0}', space=sflag, size = 0x4, scoped, tag = 'scoped memory for tpu_custom_call.1']
    #allocation7 [shape = 'u8[131072]{0}', space=vmem, size = 0x20000, scoped, tag = 'input window, operand 2, single buffered']
    #allocation8 [shape = 'u8[131072]{0}', space=vmem, size = 0x20000, scoped, tag = 'input window, operand 3, single buffered']
    #allocation9 [shape = 's32[1]{0}', space=sflag, size = 0x4, scoped, tag = 'scoped memory for tpu_custom_call.1']
    #allocation10 [shape = 'u8[65536]{0}', space=vmem, size = 0x10000, scoped, tag = 'input window, operand 4, single buffered']
    #allocation11 [shape = 'u8[4096]{0}', space=vmem, size = 0x1000, scoped, tag = 'output window, operand 0, single buffered']
    %11 = vsyncpa [#allocation3], 0
    %12 = vsyncpa [#allocation6], 0
    %13 = vsyncpa [#allocation9], 0
    %14 = vsyncpa [#allocation4], 0
    // Predicated region
    $region2: #{tpu_custom_call.1} parent=1 // pred_check
      _
    $region3: #{tpu_custom_call.1} parent=1 // pred_check_branch
      %16 = sbr.rel (0) target = $region5
    $region4: #{tpu_custom_call.1} parent=1 // pred_region
      %18 = vsyncadd [#allocation3], 0
      %s20 = sshll.u32 %s0, 4
      %s21 = int_to_ptr.hbm [resolvable:$true] %s20
      %s22 = sshll.u32 [#allocation2], 4
      %s23 = int_to_ptr.vmem [resolvable:$true] %s22
      %25 = dma.hbm_to_vmem [thread:$0]  %s21, 128, %s23, [#allocation3]
    $region5: #{tpu_custom_call.1} parent=1 // pred_fallthru
      _
    // Predicated region
    $region6: #{tpu_custom_call.1} parent=1 // pred_check
      _
    $region7: #{tpu_custom_call.1} parent=1 // pred_check_branch
      %27 = sbr.rel (0) target = $region9
    $region8: #{tpu_custom_call.1} parent=1 // pred_region
      %29 = vsyncadd [#allocation6], 0
      %s30 = sshll.u32 %s1, 4
      %s31 = int_to_ptr.hbm [resolvable:$true] %s30
      %s32 = sshll.u32 [#allocation5], 4
      %s33 = int_to_ptr.vmem [resolvable:$true] %s32
      %38 = dma.hbm_to_vmem [thread:$0]  %s31, 4096, %s33, [#allocation6], 128, 128, 8
    $region9: #{tpu_custom_call.1} parent=1 // pred_fallthru
      _
    // Predicated region
    $region10: #{tpu_custom_call.1} parent=1 // pred_check
      _
    $region11: #{tpu_custom_call.1} parent=1 // pred_check_branch
      %40 = sbr.rel (0) target = $region13
    $region12: #{tpu_custom_call.1} parent=1 // pred_region
      %42 = vsyncadd [#allocation6], 0
      %s43 = sshll.u32 %s2, 4
      %s44 = int_to_ptr.hbm [resolvable:$true] %s43
      %s45 = sshll.u32 [#allocation7], 4
      %s46 = int_to_ptr.vmem [resolvable:$true] %s45
      %51 = dma.hbm_to_vmem [thread:$0]  %s44, 4096, %s46, [#allocation6], 128, 128, 8
    $region13: #{tpu_custom_call.1} parent=1 // pred_fallthru
      _
    // Predicated region
    $region14: #{tpu_custom_call.1} parent=1 // pred_check
      _
    $region15: #{tpu_custom_call.1} parent=1 // pred_check_branch
      %53 = sbr.rel (0) target = $region17
    $region16: #{tpu_custom_call.1} parent=1 // pred_region
      %55 = vsyncadd [#allocation9], 0
      %s56 = sshll.u32 %s3, 4
      %s57 = int_to_ptr.hbm [resolvable:$true] %s56
      %s58 = sshll.u32 [#allocation8], 4
      %s59 = int_to_ptr.vmem [resolvable:$true] %s58
      %64 = dma.hbm_to_vmem [thread:$0]  %s57, 4096, %s59, [#allocation9], 128, 128, 8
    $region17: #{tpu_custom_call.1} parent=1 // pred_fallthru
      _
    // Predicated region
    $region18: #{tpu_custom_call.1} parent=1 // pred_check
      _
    $region19: #{tpu_custom_call.1} parent=1 // pred_check_branch
      %66 = sbr.rel (0) target = $region21
    $region20: #{tpu_custom_call.1} parent=1 // pred_region
      %68 = vsyncadd [#allocation9], 0
      %s69 = sshll.u32 %s4, 4
      %s70 = int_to_ptr.hbm [resolvable:$true] %s69
      %s71 = sshll.u32 [#allocation10], 4
      %s72 = int_to_ptr.vmem [resolvable:$true] %s71
      %77 = dma.hbm_to_vmem [thread:$0]  %s70, 2048, %s72, [#allocation9], 128, 128, 8
    $region21: #{tpu_custom_call.1} parent=1 // pred_fallthru
      _
    // Predicated region
    $region22: #{tpu_custom_call.1} parent=1 // pred_check
      _
    $region23: #{tpu_custom_call.1} parent=1 // pred_check_branch
      %79 = sbr.rel (0) target = $region25
    $region24: #{tpu_custom_call.1} parent=1 // pred_region
      _
    $region25: #{tpu_custom_call.1} parent=1 // pred_fallthru
      _
    // Predicated region
    $region26: #{tpu_custom_call.1} parent=1 // pred_check
      _
    $region27: #{tpu_custom_call.1} parent=1 // pred_check_branch
      %81 = sbr.rel (0) target = $region29
    $region28: #{tpu_custom_call.1} parent=1 // pred_region
      %83 = dma.done [#allocation3], 128
    $region29: #{tpu_custom_call.1} parent=1 // pred_fallthru
      _
    // Predicated region
    $region30: #{tpu_custom_call.1} parent=1 // pred_check
      _
    $region31: #{tpu_custom_call.1} parent=1 // pred_check_branch
      %85 = sbr.rel (0) target = $region33
    $region32: #{tpu_custom_call.1} parent=1 // pred_region
      %87 = dma.done [#allocation6], 4096
    $region33: #{tpu_custom_call.1} parent=1 // pred_fallthru
      _
    // Predicated region
    $region34: #{tpu_custom_call.1} parent=1 // pred_check
      _
    $region35: #{tpu_custom_call.1} parent=1 // pred_check_branch
      %89 = sbr.rel (0) target = $region37
    $region36: #{tpu_custom_call.1} parent=1 // pred_region
      %91 = dma.done [#allocation6], 4096
    $region37: #{tpu_custom_call.1} parent=1 // pred_fallthru
      _
    // Predicated region
    $region38: #{tpu_custom_call.1} parent=1 // pred_check
      _
    $region39: #{tpu_custom_call.1} parent=1 // pred_check_branch
      %93 = sbr.rel (0) target = $region41
    $region40: #{tpu_custom_call.1} parent=1 // pred_region
      %95 = dma.done [#allocation9], 4096
    $region41: #{tpu_custom_call.1} parent=1 // pred_fallthru
      _
    // Predicated region
    $region42: #{tpu_custom_call.1} parent=1 // pred_check
      _
    $region43: #{tpu_custom_call.1} parent=1 // pred_check_branch
      %97 = sbr.rel (0) target = $region45
    $region44: #{tpu_custom_call.1} parent=1 // pred_region
      %99 = dma.done [#allocation9], 2048
    $region45: #{tpu_custom_call.1} parent=1 // pred_fallthru
      _
    %v100 = vld [vmem:[#allocation2] sm:$0xff]
    %v101 = vld [vmem:[#allocation5] sm:$0xff]
    %v102 = vld [vmem:[#allocation5 + $0x8] sm:$0xff]
    %v103 = vld [vmem:[#allocation5 + $0x10] sm:$0xff]
    %v104 = vld [vmem:[#allocation5 + $0x18] sm:$0xff]
    %v105 = vld [vmem:[#allocation5 + $0x20] sm:$0xff]
    %v106 = vld [vmem:[#allocation5 + $0x28] sm:$0xff]
    %v107 = vld [vmem:[#allocation5 + $0x30] sm:$0xff]
    %v108 = vld [vmem:[#allocation5 + $0x38] sm:$0xff]
    %vm109 = vcmask 523264
    %v111 = vsel %vm109, %v100, 0
    %113 = vmatpush.msra.mxu0 0.0
    %114 = vmatpush.msra.mxu0 0.0
    %115 = vmatpush.msra.mxu0 0.0
    %116 = vmatpush.msra.mxu0 0.0
    %117 = vmatpush.msra.mxu0 0.0
    %118 = vmatpush.msra.mxu0 0.0
    %119 = vmatpush.msra.mxu0 0.0
    %120 = vmatpush.msra.mxu0 0.0
    %121 = vmatpush.msra.mxu0 %v108
    %122 = vmatpush.msra.mxu0 %v107
    %123 = vmatpush.msra.mxu0 %v106
    %124 = vmatpush.msra.mxu0 %v105
    %125 = vmatpush.msra.mxu0 %v104
    %126 = vmatpush.msra.mxu0 %v103
    %127 = vmatpush.msra.mxu0 %v102
    %128 = vmatpush.msra.mxu0 %v101
    %129 = vmatmul.f32.gmra.mxu0 %v111
    %v130 = vpop.f32.mrf.mxu0
    %v131 = vadd.f32 0.0, %v130
    %132 = vdwg.mxu0
    %v133 = vld [vmem:[#allocation10] sm:$0xff]
    %v134 = vmul.f32 %v131, %v133
    %s135 = scalar_lea.vmem [#allocation10], 8
    %v136 = vld [vmem:[%s135] sm:$0xff]
    %v137 = vrot.slane %v134, 7
    %v138 = vmul.f32 %v136, %v137
    %v139 = vadd.f32 %v134, %v138
    %s140 = scalar_lea.vmem [#allocation10], 16
    %v141 = vld [vmem:[%s140] sm:$0xff]
    %v142 = vrot.slane %v139, 6
    %v143 = vmul.f32 %v141, %v142
    %v144 = vadd.f32 %v139, %v143
    %s145 = scalar_lea.vmem [#allocation10], 24
    %v146 = vld [vmem:[%s145] sm:$0xff]
    %v147 = vrot.slane %v144, 4
    %v148 = vmul.f32 %v146, %v147
    %v149 = vadd.f32 %v144, %v148
    %v150 = vld [vmem:[#allocation7] sm:$0xff]
    %v151 = vld [vmem:[#allocation7 + $0x8] sm:$0xff]
    %v152 = vld [vmem:[#allocation7 + $0x10] sm:$0xff]
    %v153 = vld [vmem:[#allocation7 + $0x18] sm:$0xff]
    %v154 = vld [vmem:[#allocation7 + $0x20] sm:$0xff]
    %v155 = vld [vmem:[#allocation7 + $0x28] sm:$0xff]
    %v156 = vld [vmem:[#allocation7 + $0x30] sm:$0xff]
    %v157 = vld [vmem:[#allocation7 + $0x38] sm:$0xff]
    %v159 = vsel %vm109, %v149, 0
    %161 = vmatpush.msra.mxu0 0.0
    %162 = vmatpush.msra.mxu0 0.0
    %163 = vmatpush.msra.mxu0 0.0
    %164 = vmatpush.msra.mxu0 0.0
    %165 = vmatpush.msra.mxu0 0.0
    %166 = vmatpush.msra.mxu0 0.0
    %167 = vmatpush.msra.mxu0 0.0
    %168 = vmatpush.msra.mxu0 0.0
    %169 = vmatpush.msra.mxu0 %v157
    %170 = vmatpush.msra.mxu0 %v156
    %171 = vmatpush.msra.mxu0 %v155
    %172 = vmatpush.msra.mxu0 %v154
    %173 = vmatpush.msra.mxu0 %v153
    %174 = vmatpush.msra.mxu0 %v152
    %175 = vmatpush.msra.mxu0 %v151
    %176 = vmatpush.msra.mxu0 %v150
    %177 = vmatmul.f32.gmra.mxu0 %v159
    %v178 = vpop.f32.mrf.mxu0
    %v179 = vadd.f32 %v131, %v178
    %180 = vdwg.mxu0
    %v181 = vld [vmem:[%s5] sm:$0x1]
    %v183 = vperm.slane %v181, 0
    %v185 = vmul.f32 %v179, %v183
    %v186 = vtanh.pop %v185
    %v187 = vld [vmem:[#allocation8] sm:$0xff]
    %v188 = vld [vmem:[#allocation8 + $0x8] sm:$0xff]
    %v189 = vld [vmem:[#allocation8 + $0x10] sm:$0xff]
    %v190 = vld [vmem:[#allocation8 + $0x18] sm:$0xff]
    %v191 = vld [vmem:[#allocation8 + $0x20] sm:$0xff]
    %v192 = vld [vmem:[#allocation8 + $0x28] sm:$0xff]
    %v193 = vld [vmem:[#allocation8 + $0x30] sm:$0xff]
    %v194 = vld [vmem:[#allocation8 + $0x38] sm:$0xff]
    %s195 = scalar_lea.vmem [#allocation5], 64
    %v196 = vld [vmem:[%s195] sm:$0xff]
    %v197 = vld [vmem:[%s195 + $0x8] sm:$0xff]
    %v198 = vld [vmem:[%s195 + $0x10] sm:$0xff]
    %v199 = vld [vmem:[%s195 + $0x18] sm:$0xff]
    %v200 = vld [vmem:[%s195 + $0x20] sm:$0xff]
    %v201 = vld [vmem:[%s195 + $0x28] sm:$0xff]
    %v202 = vld [vmem:[%s195 + $0x30] sm:$0xff]
    %v203 = vld [vmem:[%s195 + $0x38] sm:$0xff]
    %v205 = vsel %vm109, %v186, 0
    %207 = vmatpush.msra.mxu0 0.0
    %208 = vmatpush.msra.mxu0 0.0
    %209 = vmatpush.msra.mxu0 0.0
    %210 = vmatpush.msra.mxu0 0.0
    %211 = vmatpush.msra.mxu0 0.0
    %212 = vmatpush.msra.mxu0 0.0
    %213 = vmatpush.msra.mxu0 0.0
    %214 = vmatpush.msra.mxu0 0.0
    %215 = vmatpush.msra.mxu0 %v203
    %216 = vmatpush.msra.mxu0 %v202
    %217 = vmatpush.msra.mxu0 %v201
    %218 = vmatpush.msra.mxu0 %v200
    %219 = vmatpush.msra.mxu0 %v199
    %220 = vmatpush.msra.mxu0 %v198
    %221 = vmatpush.msra.mxu0 %v197
    %222 = vmatpush.msra.mxu0 %v196
    %223 = vmatmul.f32.gmra.mxu0 %v205
    %v224 = vpop.f32.mrf.mxu0
    %v225 = vadd.f32 0.0, %v224
    %226 = vdwg.mxu0
    %s227 = scalar_lea.vmem [#allocation10], 32
    %v228 = vld [vmem:[%s227] sm:$0xff]
    %v229 = vmul.f32 %v225, %v228
    %s230 = scalar_lea.vmem [#allocation10], 40
    %v231 = vld [vmem:[%s230] sm:$0xff]
    %v232 = vrot.slane %v229, 7
    %v233 = vmul.f32 %v231, %v232
    %v234 = vadd.f32 %v229, %v233
    %s235 = scalar_lea.vmem [#allocation10], 48
    %v236 = vld [vmem:[%s235] sm:$0xff]
    %v237 = vrot.slane %v234, 6
    %v238 = vmul.f32 %v236, %v237
    %v239 = vadd.f32 %v234, %v238
    %s240 = scalar_lea.vmem [#allocation10], 56
    %v241 = vld [vmem:[%s240] sm:$0xff]
    %v242 = vrot.slane %v239, 4
    %v243 = vmul.f32 %v241, %v242
    %v244 = vadd.f32 %v239, %v243
    %s245 = scalar_lea.vmem [#allocation7], 64
    %v246 = vld [vmem:[%s245] sm:$0xff]
    %v247 = vld [vmem:[%s245 + $0x8] sm:$0xff]
    %v248 = vld [vmem:[%s245 + $0x10] sm:$0xff]
    %v249 = vld [vmem:[%s245 + $0x18] sm:$0xff]
    %v250 = vld [vmem:[%s245 + $0x20] sm:$0xff]
    %v251 = vld [vmem:[%s245 + $0x28] sm:$0xff]
    %v252 = vld [vmem:[%s245 + $0x30] sm:$0xff]
    %v253 = vld [vmem:[%s245 + $0x38] sm:$0xff]
    %v255 = vsel %vm109, %v244, 0
    %257 = vmatpush.msra.mxu0 0.0
    %258 = vmatpush.msra.mxu0 0.0
    %259 = vmatpush.msra.mxu0 0.0
    %260 = vmatpush.msra.mxu0 0.0
    %261 = vmatpush.msra.mxu0 0.0
    %262 = vmatpush.msra.mxu0 0.0
    %263 = vmatpush.msra.mxu0 0.0
    %264 = vmatpush.msra.mxu0 0.0
    %265 = vmatpush.msra.mxu0 %v253
    %266 = vmatpush.msra.mxu0 %v252
    %267 = vmatpush.msra.mxu0 %v251
    %268 = vmatpush.msra.mxu0 %v250
    %269 = vmatpush.msra.mxu0 %v249
    %270 = vmatpush.msra.mxu0 %v248
    %271 = vmatpush.msra.mxu0 %v247
    %272 = vmatpush.msra.mxu0 %v246
    %273 = vmatmul.f32.gmra.mxu0 %v255
    %v274 = vpop.f32.mrf.mxu0
    %v275 = vadd.f32 %v225, %v274
    %276 = vdwg.mxu0
    %s277 = scalar_lea.vmem %s5, 1
    %v278 = vld [vmem:[%s277] sm:$0x1]
    %v280 = vperm.slane %v278, 0
    %v282 = vmul.f32 %v275, %v280
    %v283 = vtanh.pop %v282
    %s284 = scalar_lea.vmem [#allocation8], 64
    %v285 = vld [vmem:[%s284] sm:$0xff]
    %v286 = vld [vmem:[%s284 + $0x8] sm:$0xff]
    %v287 = vld [vmem:[%s284 + $0x10] sm:$0xff]
    %v288 = vld [vmem:[%s284 + $0x18] sm:$0xff]
    %v289 = vld [vmem:[%s284 + $0x20] sm:$0xff]
    %v290 = vld [vmem:[%s284 + $0x28] sm:$0xff]
    %v291 = vld [vmem:[%s284 + $0x30] sm:$0xff]
    %v292 = vld [vmem:[%s284 + $0x38] sm:$0xff]
    %v294 = vsel %vm109, %v283, 0
    %296 = vmatpush.msra.mxu0 0.0
    %297 = vmatpush.msra.mxu0 0.0
    %298 = vmatpush.msra.mxu0 0.0
    %299 = vmatpush.msra.mxu0 0.0
    %300 = vmatpush.msra.mxu0 0.0
    %301 = vmatpush.msra.mxu0 0.0
    %302 = vmatpush.msra.mxu0 0.0
    %303 = vmatpush.msra.mxu0 0.0
    %304 = vmatpush.msra.mxu0 %v292
    %305 = vmatpush.msra.mxu0 %v291
    %306 = vmatpush.msra.mxu0 %v290
    %307 = vmatpush.msra.mxu0 %v289
    %308 = vmatpush.msra.mxu0 %v288
    %309 = vmatpush.msra.mxu0 %v287
    %310 = vmatpush.msra.mxu0 %v286
    %311 = vmatpush.msra.mxu0 %v285
    %312 = vmatmul.f32.gmra.mxu0 %v294
    %v313 = vpop.f32.mrf.mxu0
    %v314 = vadd.f32 0.0, %v313
    %315 = vdwg.mxu0
    %316 = vmatpush.msra.mxu0 0.0
    %317 = vmatpush.msra.mxu0 0.0
    %318 = vmatpush.msra.mxu0 0.0
    %319 = vmatpush.msra.mxu0 0.0
    %320 = vmatpush.msra.mxu0 0.0
    %321 = vmatpush.msra.mxu0 0.0
    %322 = vmatpush.msra.mxu0 0.0
    %323 = vmatpush.msra.mxu0 0.0
    %324 = vmatpush.msra.mxu0 %v194
    %325 = vmatpush.msra.mxu0 %v193
    %326 = vmatpush.msra.mxu0 %v192
    %327 = vmatpush.msra.mxu0 %v191
    %328 = vmatpush.msra.mxu0 %v190
    %329 = vmatpush.msra.mxu0 %v189
    %330 = vmatpush.msra.mxu0 %v188
    %331 = vmatpush.msra.mxu0 %v187
    %332 = vmatmul.f32.gmra.mxu0 %v205
    %v333 = vpop.f32.mrf.mxu0
    %v334 = vadd.f32 %v314, %v333
    %335 = vdwg.mxu0
    %s336 = scalar_lea.vmem [#allocation5], 128
    %v337 = vld [vmem:[%s336] sm:$0xff]
    %v338 = vld [vmem:[%s336 + $0x8] sm:$0xff]
    %v339 = vld [vmem:[%s336 + $0x10] sm:$0xff]
    %v340 = vld [vmem:[%s336 + $0x18] sm:$0xff]
    %v341 = vld [vmem:[%s336 + $0x20] sm:$0xff]
    %v342 = vld [vmem:[%s336 + $0x28] sm:$0xff]
    %v343 = vld [vmem:[%s336 + $0x30] sm:$0xff]
    %v344 = vld [vmem:[%s336 + $0x38] sm:$0xff]
    %345 = vmatpush.msra.mxu0 0.0
    %346 = vmatpush.msra.mxu0 0.0
    %347 = vmatpush.msra.mxu0 0.0
    %348 = vmatpush.msra.mxu0 0.0
    %349 = vmatpush.msra.mxu0 0.0
    %350 = vmatpush.msra.mxu0 0.0
    %351 = vmatpush.msra.mxu0 0.0
    %352 = vmatpush.msra.mxu0 0.0
    %353 = vmatpush.msra.mxu0 %v344
    %354 = vmatpush.msra.mxu0 %v343
    %355 = vmatpush.msra.mxu0 %v342
    %356 = vmatpush.msra.mxu0 %v341
    %357 = vmatpush.msra.mxu0 %v340
    %358 = vmatpush.msra.mxu0 %v339
    %359 = vmatpush.msra.mxu0 %v338
    %360 = vmatpush.msra.mxu0 %v337
    %361 = vmatmul.f32.gmra.mxu0 %v294
    %v362 = vpop.f32.mrf.mxu0
    %v363 = vadd.f32 0.0, %v362
    %364 = vdwg.mxu0
    %s365 = scalar_lea.vmem [#allocation10], 64
    %v366 = vld [vmem:[%s365] sm:$0xff]
    %v367 = vmul.f32 %v363, %v366
    %s368 = scalar_lea.vmem [#allocation10], 72
    %v369 = vld [vmem:[%s368] sm:$0xff]
    %v370 = vrot.slane %v367, 7
    %v371 = vmul.f32 %v369, %v370
    %v372 = vadd.f32 %v367, %v371
    %s373 = scalar_lea.vmem [#allocation10], 80
    %v374 = vld [vmem:[%s373] sm:$0xff]
    %v375 = vrot.slane %v372, 6
    %v376 = vmul.f32 %v374, %v375
    %v377 = vadd.f32 %v372, %v376
    %s378 = scalar_lea.vmem [#allocation10], 88
    %v379 = vld [vmem:[%s378] sm:$0xff]
    %v380 = vrot.slane %v377, 4
    %v381 = vmul.f32 %v379, %v380
    %v382 = vadd.f32 %v377, %v381
    %s383 = scalar_lea.vmem [#allocation7], 128
    %v384 = vld [vmem:[%s383] sm:$0xff]
    %v385 = vld [vmem:[%s383 + $0x8] sm:$0xff]
    %v386 = vld [vmem:[%s383 + $0x10] sm:$0xff]
    %v387 = vld [vmem:[%s383 + $0x18] sm:$0xff]
    %v388 = vld [vmem:[%s383 + $0x20] sm:$0xff]
    %v389 = vld [vmem:[%s383 + $0x28] sm:$0xff]
    %v390 = vld [vmem:[%s383 + $0x30] sm:$0xff]
    %v391 = vld [vmem:[%s383 + $0x38] sm:$0xff]
    %v393 = vsel %vm109, %v382, 0
    %395 = vmatpush.msra.mxu0 0.0
    %396 = vmatpush.msra.mxu0 0.0
    %397 = vmatpush.msra.mxu0 0.0
    %398 = vmatpush.msra.mxu0 0.0
    %399 = vmatpush.msra.mxu0 0.0
    %400 = vmatpush.msra.mxu0 0.0
    %401 = vmatpush.msra.mxu0 0.0
    %402 = vmatpush.msra.mxu0 0.0
    %403 = vmatpush.msra.mxu0 %v391
    %404 = vmatpush.msra.mxu0 %v390
    %405 = vmatpush.msra.mxu0 %v389
    %406 = vmatpush.msra.mxu0 %v388
    %407 = vmatpush.msra.mxu0 %v387
    %408 = vmatpush.msra.mxu0 %v386
    %409 = vmatpush.msra.mxu0 %v385
    %410 = vmatpush.msra.mxu0 %v384
    %411 = vmatmul.f32.gmra.mxu0 %v393
    %v412 = vpop.f32.mrf.mxu0
    %v413 = vadd.f32 %v363, %v412
    %414 = vdwg.mxu0
    %s415 = scalar_lea.vmem %s5, 2
    %v416 = vld [vmem:[%s415] sm:$0x1]
    %v418 = vperm.slane %v416, 0
    %v420 = vmul.f32 %v413, %v418
    %v421 = vtanh.pop %v420
    %s422 = scalar_lea.vmem [#allocation8], 128
    %v423 = vld [vmem:[%s422] sm:$0xff]
    %v424 = vld [vmem:[%s422 + $0x8] sm:$0xff]
    %v425 = vld [vmem:[%s422 + $0x10] sm:$0xff]
    %v426 = vld [vmem:[%s422 + $0x18] sm:$0xff]
    %v427 = vld [vmem:[%s422 + $0x20] sm:$0xff]
    %v428 = vld [vmem:[%s422 + $0x28] sm:$0xff]
    %v429 = vld [vmem:[%s422 + $0x30] sm:$0xff]
    %v430 = vld [vmem:[%s422 + $0x38] sm:$0xff]
    %v432 = vsel %vm109, %v421, 0
    %434 = vmatpush.msra.mxu0 0.0
    %435 = vmatpush.msra.mxu0 0.0
    %436 = vmatpush.msra.mxu0 0.0
    %437 = vmatpush.msra.mxu0 0.0
    %438 = vmatpush.msra.mxu0 0.0
    %439 = vmatpush.msra.mxu0 0.0
    %440 = vmatpush.msra.mxu0 0.0
    %441 = vmatpush.msra.mxu0 0.0
    %442 = vmatpush.msra.mxu0 %v430
    %443 = vmatpush.msra.mxu0 %v429
    %444 = vmatpush.msra.mxu0 %v428
    %445 = vmatpush.msra.mxu0 %v427
    %446 = vmatpush.msra.mxu0 %v426
    %447 = vmatpush.msra.mxu0 %v425
    %448 = vmatpush.msra.mxu0 %v424
    %449 = vmatpush.msra.mxu0 %v423
    %450 = vmatmul.f32.gmra.mxu0 %v432
    %v451 = vpop.f32.mrf.mxu0
    %v452 = vadd.f32 0.0, %v451
    %453 = vdwg.mxu0
    %v454 = vadd.f32 %v334, %v452
    %s455 = scalar_lea.vmem [#allocation5], 192
    %v456 = vld [vmem:[%s455] sm:$0xff]
    %v457 = vld [vmem:[%s455 + $0x8] sm:$0xff]
    %v458 = vld [vmem:[%s455 + $0x10] sm:$0xff]
    %v459 = vld [vmem:[%s455 + $0x18] sm:$0xff]
    %v460 = vld [vmem:[%s455 + $0x20] sm:$0xff]
    %v461 = vld [vmem:[%s455 + $0x28] sm:$0xff]
    %v462 = vld [vmem:[%s455 + $0x30] sm:$0xff]
    %v463 = vld [vmem:[%s455 + $0x38] sm:$0xff]
    %464 = vmatpush.msra.mxu0 0.0
    %465 = vmatpush.msra.mxu0 0.0
    %466 = vmatpush.msra.mxu0 0.0
    %467 = vmatpush.msra.mxu0 0.0
    %468 = vmatpush.msra.mxu0 0.0
    %469 = vmatpush.msra.mxu0 0.0
    %470 = vmatpush.msra.mxu0 0.0
    %471 = vmatpush.msra.mxu0 0.0
    %472 = vmatpush.msra.mxu0 %v463
    %473 = vmatpush.msra.mxu0 %v462
    %474 = vmatpush.msra.mxu0 %v461
    %475 = vmatpush.msra.mxu0 %v460
    %476 = vmatpush.msra.mxu0 %v459
    %477 = vmatpush.msra.mxu0 %v458
    %478 = vmatpush.msra.mxu0 %v457
    %479 = vmatpush.msra.mxu0 %v456
    %480 = vmatmul.f32.gmra.mxu0 %v432
    %v481 = vpop.f32.mrf.mxu0
    %v482 = vadd.f32 0.0, %v481
    %483 = vdwg.mxu0
    %s484 = scalar_lea.vmem [#allocation10], 96
    %v485 = vld [vmem:[%s484] sm:$0xff]
    %v486 = vmul.f32 %v482, %v485
    %s487 = scalar_lea.vmem [#allocation10], 104
    %v488 = vld [vmem:[%s487] sm:$0xff]
    %v489 = vrot.slane %v486, 7
    %v490 = vmul.f32 %v488, %v489
    %v491 = vadd.f32 %v486, %v490
    %s492 = scalar_lea.vmem [#allocation10], 112
    %v493 = vld [vmem:[%s492] sm:$0xff]
    %v494 = vrot.slane %v491, 6
    %v495 = vmul.f32 %v493, %v494
    %v496 = vadd.f32 %v491, %v495
    %s497 = scalar_lea.vmem [#allocation10], 120
    %v498 = vld [vmem:[%s497] sm:$0xff]
    %v499 = vrot.slane %v496, 4
    %v500 = vmul.f32 %v498, %v499
    %v501 = vadd.f32 %v496, %v500
    %s502 = scalar_lea.vmem [#allocation7], 192
    %v503 = vld [vmem:[%s502] sm:$0xff]
    %v504 = vld [vmem:[%s502 + $0x8] sm:$0xff]
    %v505 = vld [vmem:[%s502 + $0x10] sm:$0xff]
    %v506 = vld [vmem:[%s502 + $0x18] sm:$0xff]
    %v507 = vld [vmem:[%s502 + $0x20] sm:$0xff]
    %v508 = vld [vmem:[%s502 + $0x28] sm:$0xff]
    %v509 = vld [vmem:[%s502 + $0x30] sm:$0xff]
    %v510 = vld [vmem:[%s502 + $0x38] sm:$0xff]
    %v512 = vsel %vm109, %v501, 0
    %514 = vmatpush.msra.mxu0 0.0
    %515 = vmatpush.msra.mxu0 0.0
    %516 = vmatpush.msra.mxu0 0.0
    %517 = vmatpush.msra.mxu0 0.0
    %518 = vmatpush.msra.mxu0 0.0
    %519 = vmatpush.msra.mxu0 0.0
    %520 = vmatpush.msra.mxu0 0.0
    %521 = vmatpush.msra.mxu0 0.0
    %522 = vmatpush.msra.mxu0 %v510
    %523 = vmatpush.msra.mxu0 %v509
    %524 = vmatpush.msra.mxu0 %v508
    %525 = vmatpush.msra.mxu0 %v507
    %526 = vmatpush.msra.mxu0 %v506
    %527 = vmatpush.msra.mxu0 %v505
    %528 = vmatpush.msra.mxu0 %v504
    %529 = vmatpush.msra.mxu0 %v503
    %530 = vmatmul.f32.gmra.mxu0 %v512
    %v531 = vpop.f32.mrf.mxu0
    %v532 = vadd.f32 %v482, %v531
    %533 = vdwg.mxu0
    %s534 = scalar_lea.vmem %s5, 3
    %v535 = vld [vmem:[%s534] sm:$0x1]
    %v537 = vperm.slane %v535, 0
    %v539 = vmul.f32 %v532, %v537
    %v540 = vtanh.pop %v539
    %s541 = scalar_lea.vmem [#allocation8], 192
    %v542 = vld [vmem:[%s541] sm:$0xff]
    %v543 = vld [vmem:[%s541 + $0x8] sm:$0xff]
    %v544 = vld [vmem:[%s541 + $0x10] sm:$0xff]
    %v545 = vld [vmem:[%s541 + $0x18] sm:$0xff]
    %v546 = vld [vmem:[%s541 + $0x20] sm:$0xff]
    %v547 = vld [vmem:[%s541 + $0x28] sm:$0xff]
    %v548 = vld [vmem:[%s541 + $0x30] sm:$0xff]
    %v549 = vld [vmem:[%s541 + $0x38] sm:$0xff]
    %v551 = vsel %vm109, %v540, 0
    %553 = vmatpush.msra.mxu0 0.0
    %554 = vmatpush.msra.mxu0 0.0
    %555 = vmatpush.msra.mxu0 0.0
    %556 = vmatpush.msra.mxu0 0.0
    %557 = vmatpush.msra.mxu0 0.0
    %558 = vmatpush.msra.mxu0 0.0
    %559 = vmatpush.msra.mxu0 0.0
    %560 = vmatpush.msra.mxu0 0.0
    %561 = vmatpush.msra.mxu0 %v549
    %562 = vmatpush.msra.mxu0 %v548
    %563 = vmatpush.msra.mxu0 %v547
    %564 = vmatpush.msra.mxu0 %v546
    %565 = vmatpush.msra.mxu0 %v545
    %566 = vmatpush.msra.mxu0 %v544
    %567 = vmatpush.msra.mxu0 %v543
    %568 = vmatpush.msra.mxu0 %v542
    %569 = vmatmul.f32.gmra.mxu0 %v551
    %v570 = vpop.f32.mrf.mxu0
    %v571 = vadd.f32 0.0, %v570
    %572 = vdwg.mxu0
    %v573 = vadd.f32 %v454, %v571
    %574 = vst.msk [vmem:[#allocation11] sm:$0xff] %vm109, %v573
    // Predicated region
    $region46: #{tpu_custom_call.1} parent=1 // pred_check
      _
    $region47: #{tpu_custom_call.1} parent=1 // pred_check_branch
      %576 = sbr.rel (0) target = $region49
    $region48: #{tpu_custom_call.1} parent=1 // pred_region
      %578 = vsyncadd [#allocation4], 0
      %s580 = sshll.u32 [#allocation11], 4
      %s581 = int_to_ptr.vmem [resolvable:$true] %s580
      %s582 = sshll.u32 %s6, 4
      %s583 = int_to_ptr.hbm [resolvable:$true] %s582
      %585 = dma.vmem_to_hbm [thread:$0]  %s581, 128, %s583, [#allocation4]
    $region49: #{tpu_custom_call.1} parent=1 // pred_fallthru
      _
    // Predicated region
    $region50: #{tpu_custom_call.1} parent=1 // pred_check
      _
    $region51: #{tpu_custom_call.1} parent=1 // pred_check_branch
      %587 = sbr.rel (0) target = $region53
    $region52: #{tpu_custom_call.1} parent=1 // pred_region
      %589 = dma.done [#allocation4], 128
    $region53: #{tpu_custom_call.1} parent=1 // pred_fallthru
      _
    %590 = vsyncpa [#allocation3], 1
    %591 = vsyncpa [#allocation6], 1
    %592 = vsyncpa [#allocation9], 1
    %593 = vsyncpa [#allocation4], 1

</llo_original>
